<compile_context>
chip_gen: v7x
topology: tpu7x:2x2x1
jax: 0.10.0
libtpu: 0.0.40
codegen_flags: <defaults>
</compile_context>

<pallas_src>
import math

import jax
import jax.numpy as jnp
from jax.experimental import pallas as pl
from jax.experimental.pallas import tpu as pltpu


def _round_up(n: int, m: int) -> int:
    return ((n + m - 1) // m) * m


def _default_act_dtype():
    """bf16 tanh/activations on chips with bf16 VPU/EUP (v6e, v7x); f32 otherwise."""
    try:
        kind = jax.devices()[0].device_kind.lower()
    except Exception:
        return jnp.float32
    if any(v in kind for v in ("v2", "v3", "v4", "v5")):
        return jnp.float32
    return jnp.bfloat16


def _make_ffn_kernel(depth: int, act_dtype):
    """(t,s,v) -> [Linear+Tanh]*depth -> fused (y,z) head; lane-dense [H, TB]."""
    hb_col = 4 + (depth - 1)  # column of the head bias in the packed slab

    def kernel(x_ref, small_ref, w_hid_ref, w_head_ref, o_ref):
        # x_ref      : [8, TB]  f32   rows 0..2 = t, s, v
        # small_ref  : [H, NC]  f32   packed layer-1 weights + all biases
        # w_hid_ref  : [max(depth-1,1), H, H] bf16
        # w_head_ref : [8, H]   bf16  rows 0..2 = y/z heads, rows 3..7 zero
        # o_ref      : [8, TB]  f32
        t = x_ref[0:1, :]                                   # [1, TB]
        s = x_ref[1:2, :]
        v = x_ref[2:3, :]

        small = small_ref[...]                              # [H, NC] f32 (load once)
        w1t = small[:, 0:1]
        w1s = small[:, 1:2]
        w1v = small[:, 2:3]
        b1 = small[:, 3:4]

        # ---- Layer 1 (3 -> H): VPU broadcast-FMA in f32 --------------------
        pre = w1t * t + w1s * s + w1v * v + b1              # [H, TB] f32
        h = jnp.tanh(pre.astype(act_dtype)).astype(jnp.bfloat16)

        # ---- Hidden layers (H -> H): bf16 MXU, f32 accumulate --------------
        for layer in range(depth - 1):
            w = w_hid_ref[layer]                            # [H, H] bf16
            b = small[:, 4 + layer:5 + layer]               # [H, 1] f32
            acc = jnp.dot(w, h, preferred_element_type=jnp.float32) + b
            h = jnp.tanh(acc.astype(act_dtype)).astype(jnp.bfloat16)

        # ---- Fused y/z head (H -> 3, padded to 8 rows): unmasked store -----
        bh = small[0:8, hb_col:hb_col + 1]                  # [8, 1] f32
        o_ref[...] = (
            jnp.dot(w_head_ref[...], h, preferred_element_type=jnp.float32) + bh
        )

    return kernel


def init_params(key, hidden=64, depth=3):
    """Packed parameters mirroring nn.Linear's uniform(-1/sqrt(fan_in)) init.

    Returns (small, w_hid, w_head):
      small  [H, NC] f32 : cols 0..2 = layer-1 weight columns (t,s,v), col 3 = b1,
                           cols 4..4+depth-2 = hidden biases,
                           col depth+3 (rows 0..2) = head bias (y, z0, z1).
      w_hid  [max(depth-1,1), H, H] bf16 : hidden weights, PyTorch [out, in].
      w_head [8, H] bf16 : row 0 = y_head, rows 1..2 = z_head, rows 3..7 zero.
    """
    H = hidden
    n_small = max(8, depth + 4)
    small = jnp.zeros((H, n_small), jnp.float32)

    # Layer 1 (in=3 -> H).
    key, kw, kb = jax.random.split(key, 3)
    bound = 1.0 / math.sqrt(3)
    w1 = jax.random.uniform(kw, (H, 3), jnp.float32, -bound, bound)
    b1 = jax.random.uniform(kb, (H,), jnp.float32, -bound, bound)
    small = small.at[:, 0:3].set(w1).at[:, 3].set(b1)

    # Hidden layers (H -> H).
    bound = 1.0 / math.sqrt(H)
    w_hid = jnp.zeros((max(depth - 1, 1), H, H), jnp.float32)
    for layer in range(depth - 1):
        key, kw, kb = jax.random.split(key, 3)
        w = jax.random.uniform(kw, (H, H), jnp.float32, -bound, bound)
        b = jax.random.uniform(kb, (H,), jnp.float32, -bound, bound)
        w_hid = w_hid.at[layer].set(w)
        small = small.at[:, 4 + layer].set(b)

    # Heads: y (1 row) + z (2 rows), padded with zeros to 8 rows.
    key, kwy, kby, kwz, kbz = jax.random.split(key, 5)
    wy = jax.random.uniform(kwy, (1, H), jnp.float32, -bound, bound)
    by = jax.random.uniform(kby, (1,), jnp.float32, -bound, bound)
    wz = jax.random.uniform(kwz, (2, H), jnp.float32, -bound, bound)
    bz = jax.random.uniform(kbz, (2,), jnp.float32, -bound, bound)
    w_head = jnp.zeros((8, H), jnp.float32).at[0:1].set(wy).at[1:3].set(wz)
    hb_col = 4 + (depth - 1)
    small = small.at[0, hb_col].set(by[0]).at[1:3, hb_col].set(bz)

    return small, w_hid.astype(jnp.bfloat16), w_head.astype(jnp.bfloat16)


def feed_forward_nn(t, s, v, params, *, depth=3, block_b=4096, act_dtype=None):
    """Pallas-backed forward pass. t, s, v: [B] f32. Returns (y [B], z [B, 2])."""
    if act_dtype is None:
        act_dtype = _default_act_dtype()
    small, w_hid, w_head = params
    B = t.shape[0]

    # Batch tile: multiple of 128 lanes, large enough to amortize per-step
    # overhead, but capped so the grid keeps >= 2 steps (v7x dual-TC sharding).
    b128 = _round_up(B, 128)
    tb = max(128, (min(block_b, b128) // 128) * 128)
    if b128 >= 256 and pl.cdiv(b128, tb) < 2:
        tb = max(128, _round_up(pl.cdiv(b128, 2), 128))
    b_pad = _round_up(B, tb)
    grid = (b_pad // tb,)

    # Single [8, b_pad] f32 input slab (rows 0..2 = t, s, v).
    x = jnp.stack(
        [t.astype(jnp.float32), s.astype(jnp.float32), v.astype(jnp.float32)], axis=0
    )
    x = jnp.pad(x, ((0, 5), (0, b_pad - B)))

    # Full-array blocks with constant index maps -> params stay VMEM-resident.
    param_specs = [
        pl.BlockSpec(p.shape, lambda i, n=p.ndim: (0,) * n)
        for p in (small, w_hid, w_head)
    ]

    compiler_kwargs = dict(dimension_semantics=("parallel",))
    if tb >= 16384:
        # Very large tiles can exceed v5e's 16 MiB default scoped-VMEM limit.
        compiler_kwargs["vmem_limit_bytes"] = 64 * 1024 * 1024

    out = pl.pallas_call(
        _make_ffn_kernel(depth, act_dtype),
        grid=grid,
        in_specs=[pl.BlockSpec((8, tb), lambda i: (0, i))] + param_specs,
        out_specs=pl.BlockSpec((8, tb), lambda i: (0, i)),
        out_shape=jax.ShapeDtypeStruct((8, b_pad), jnp.float32),
        compiler_params=pltpu.CompilerParams(**compiler_kwargs),
    )(x, small, w_hid, w_head)

    y = out[0, :B]          # [B]
    z = out[1:3, :B].T      # [B, 2]
    return y, z


def _reference(t, s, v, params, *, depth=3, act_dtype=jnp.float32):
    """Pure-JAX reference mirroring the kernel's math and precision policy."""
    # TODO(synk): downstream BSDE users should also validate end-to-end error
    # against a true f32 (non-bf16) FeedForwardNN if the solve is sensitive.
    small, w_hid, w_head = params
    x = jnp.stack([t, s, v], axis=0).astype(jnp.float32)        # [3, B]
    pre = jnp.dot(small[:, 0:3], x) + small[:, 3:4]
    h = jnp.tanh(pre.astype(act_dtype)).astype(jnp.bfloat16)
    for layer in range(depth - 1):
        acc = (jnp.dot(w_hid[layer], h, preferred_element_type=jnp.float32)
               + small[:, 4 + layer:5 + layer])
        h = jnp.tanh(acc.astype(act_dtype)).astype(jnp.bfloat16)
    hb_col = 4 + (depth - 1)
    o = (jnp.dot(w_head, h, preferred_element_type=jnp.float32)
         + small[0:8, hb_col:hb_col + 1])
    return o[0], o[1:3].T


if __name__ == "__main__":
    B, HIDDEN, DEPTH = 1000, 64, 3   # exercises padding + a 2-step grid

    key = jax.random.PRNGKey(0)
    kt, ks, kv, kp = jax.random.split(key, 4)
    t = jax.random.normal(kt, (B,), jnp.float32)
    s = jax.random.normal(ks, (B,), jnp.float32)
    v = jax.random.normal(kv, (B,), jnp.float32)

    params = init_params(kp, hidden=HIDDEN, depth=DEPTH)
    act_dtype = _default_act_dtype()

    y, z = feed_forward_nn(t, s, v, params, depth=DEPTH, act_dtype=act_dtype)
    jax.block_until_ready((y, z))

    y_ref, z_ref = _reference(t, s, v, params, depth=DEPTH, act_dtype=act_dtype)
    assert y.shape == (B,) and z.shape == (B, 2)
    # bf16 GEMMs / activations -> loosened tolerance vs the matched reference.
    assert jnp.allclose(y, y_ref, atol=2e-2, rtol=2e-2)
    assert jnp.allclose(z, z_ref, atol=2e-2, rtol=2e-2)

    print("KERNEL_OK")
</pallas_src>

<mosaic_0001>
module attributes {stable_mosaic.version = 11 : i64} {
  func.func @kernel(%arg0: i32, %arg1: memref<8x512xf32, #tpu.memory_space<vmem>>, %arg2: memref<64x8xf32, #tpu.memory_space<vmem>>, %arg3: memref<2x64x64xbf16, #tpu.memory_space<vmem>>, %arg4: memref<8x64xbf16, #tpu.memory_space<vmem>>, %arg5: memref<8x512xf32, #tpu.memory_space<vmem>>) attributes {dimension_semantics = [#tpu.dimension_semantics<parallel>], iteration_bounds = array<i64: 2>, scalar_prefetch = 0 : i64, scratch_operands = 0 : i64, tpu.core_type = #tpu.core_type<tc>, window_params = [{transform_indices = @transform_0, window_bounds = array<i64: 8, 512>}, {pipeline_mode = #tpu.pipeline_mode<synchronous>, transform_indices = @transform_1, window_bounds = array<i64: 64, 8>}, {pipeline_mode = #tpu.pipeline_mode<synchronous>, transform_indices = @transform_2, window_bounds = array<i64: 2, 64, 64>}, {pipeline_mode = #tpu.pipeline_mode<synchronous>, transform_indices = @transform_3, window_bounds = array<i64: 8, 64>}, {transform_indices = @transform_4, window_bounds = array<i64: 8, 512>}]} {
    %c0 = arith.constant 0 : index
    %c0_0 = arith.constant 0 : index
    %0 = vector.load %arg1[%c0, %c0_0] : memref<8x512xf32, #tpu.memory_space<vmem>>, vector<1x512xf32>
    %c1 = arith.constant 1 : index
    %c0_1 = arith.constant 0 : index
    %1 = vector.load %arg1[%c1, %c0_1] : memref<8x512xf32, #tpu.memory_space<vmem>>, vector<1x512xf32>
    %c2 = arith.constant 2 : index
    %c0_2 = arith.constant 0 : index
    %2 = vector.load %arg1[%c2, %c0_2] : memref<8x512xf32, #tpu.memory_space<vmem>>, vector<1x512xf32>
    %c0_3 = arith.constant 0 : index
    %c0_4 = arith.constant 0 : index
    %3 = vector.load %arg2[%c0_3, %c0_4] : memref<64x8xf32, #tpu.memory_space<vmem>>, vector<64x8xf32>
    %4 = vector.extract_strided_slice %3 {offsets = [0, 0], sizes = [64, 1], strides = [1, 1]} : vector<64x8xf32> to vector<64x1xf32>
    %5 = vector.extract_strided_slice %3 {offsets = [0, 1], sizes = [64, 1], strides = [1, 1]} : vector<64x8xf32> to vector<64x1xf32>
    %6 = vector.extract_strided_slice %3 {offsets = [0, 2], sizes = [64, 1], strides = [1, 1]} : vector<64x8xf32> to vector<64x1xf32>
    %7 = vector.extract_strided_slice %3 {offsets = [0, 3], sizes = [64, 1], strides = [1, 1]} : vector<64x8xf32> to vector<64x1xf32>
    %8 = vector.broadcast %4 : vector<64x1xf32> to vector<64x512xf32>
    %9 = vector.broadcast %0 : vector<1x512xf32> to vector<64x512xf32>
    %10 = arith.mulf %8, %9 : vector<64x512xf32>
    %11 = vector.broadcast %5 : vector<64x1xf32> to vector<64x512xf32>
    %12 = vector.broadcast %1 : vector<1x512xf32> to vector<64x512xf32>
    %13 = arith.mulf %11, %12 : vector<64x512xf32>
    %14 = arith.addf %10, %13 : vector<64x512xf32>
    %15 = vector.broadcast %6 : vector<64x1xf32> to vector<64x512xf32>
    %16 = vector.broadcast %2 : vector<1x512xf32> to vector<64x512xf32>
    %17 = arith.mulf %15, %16 : vector<64x512xf32>
    %18 = arith.addf %14, %17 : vector<64x512xf32>
    %19 = vector.broadcast %7 : vector<64x1xf32> to vector<64x512xf32>
    %20 = arith.addf %18, %19 : vector<64x512xf32>
    %21 = arith.truncf %20 : vector<64x512xf32> to vector<64x512xbf16>
    %22 = math.tanh %21 : vector<64x512xbf16>
    %c0_5 = arith.constant 0 : index
    %c0_6 = arith.constant 0 : index
    %c0_7 = arith.constant 0 : index
    %23 = vector.load %arg3[%c0_5, %c0_6, %c0_7] : memref<2x64x64xbf16, #tpu.memory_space<vmem>>, vector<1x64x64xbf16>
    %24 = vector.shape_cast %23 : vector<1x64x64xbf16> to vector<64x64xbf16>
    %25 = vector.extract_strided_slice %3 {offsets = [0, 4], sizes = [64, 1], strides = [1, 1]} : vector<64x8xf32> to vector<64x1xf32>
    %cst = arith.constant dense<0.000000e+00> : vector<64x512xf32>
    %26 = tpu.matmul %24, %22, %cst {dimension_numbers = #tpu.dot_dimension_numbers<[1], [0], [0], [1], [0, 0, 1, 1], [], []>} : vector<64x64xbf16>, vector<64x512xbf16>, vector<64x512xf32> -> vector<64x512xf32>
    %27 = vector.broadcast %25 : vector<64x1xf32> to vector<64x512xf32>
    %28 = arith.addf %26, %27 : vector<64x512xf32>
    %29 = arith.truncf %28 : vector<64x512xf32> to vector<64x512xbf16>
    %30 = math.tanh %29 : vector<64x512xbf16>
    %c1_8 = arith.constant 1 : index
    %c0_9 = arith.constant 0 : index
    %c0_10 = arith.constant 0 : index
    %31 = vector.load %arg3[%c1_8, %c0_9, %c0_10] : memref<2x64x64xbf16, #tpu.memory_space<vmem>>, vector<1x64x64xbf16>
    %32 = vector.shape_cast %31 : vector<1x64x64xbf16> to vector<64x64xbf16>
    %33 = vector.extract_strided_slice %3 {offsets = [0, 5], sizes = [64, 1], strides = [1, 1]} : vector<64x8xf32> to vector<64x1xf32>
    %cst_11 = arith.constant dense<0.000000e+00> : vector<64x512xf32>
    %34 = tpu.matmul %32, %30, %cst_11 {dimension_numbers = #tpu.dot_dimension_numbers<[1], [0], [0], [1], [0, 0, 1, 1], [], []>} : vector<64x64xbf16>, vector<64x512xbf16>, vector<64x512xf32> -> vector<64x512xf32>
    %35 = vector.broadcast %33 : vector<64x1xf32> to vector<64x512xf32>
    %36 = arith.addf %34, %35 : vector<64x512xf32>
    %37 = arith.truncf %36 : vector<64x512xf32> to vector<64x512xbf16>
    %38 = math.tanh %37 : vector<64x512xbf16>
    %39 = vector.extract_strided_slice %3 {offsets = [0, 6], sizes = [8, 1], strides = [1, 1]} : vector<64x8xf32> to vector<8x1xf32>
    %c0_12 = arith.constant 0 : index
    %c0_13 = arith.constant 0 : index
    %40 = vector.load %arg4[%c0_12, %c0_13] : memref<8x64xbf16, #tpu.memory_space<vmem>>, vector<8x64xbf16>
    %cst_14 = arith.constant dense<0.000000e+00> : vector<8x512xf32>
    %41 = tpu.matmul %40, %38, %cst_14 {dimension_numbers = #tpu.dot_dimension_numbers<[1], [0], [0], [1], [0, 0, 1, 1], [], []>} : vector<8x64xbf16>, vector<64x512xbf16>, vector<8x512xf32> -> vector<8x512xf32>
    %42 = vector.broadcast %39 : vector<8x1xf32> to vector<8x512xf32>
    %43 = arith.addf %41, %42 : vector<8x512xf32>
    %c0_15 = arith.constant 0 : index
    %c0_16 = arith.constant 0 : index
    %44 = vector.load %arg5[%c0_15, %c0_16] : memref<8x512xf32, #tpu.memory_space<vmem>>, vector<8x512xf32>
    tpu.vector_store %arg5[%c0_15, %c0_16], %43 {strides = array<i32>} : memref<8x512xf32, #tpu.memory_space<vmem>>, vector<8x512xf32>,
    return
  }
  func.func @transform_0(%arg0: i32) -> (i32, i32) {
    %c0_i32 = arith.constant 0 : i32
    %c0_i32_0 = arith.constant 0 : i32
    return %c0_i32, %arg0 : i32, i32
  }
  func.func @transform_1(%arg0: i32) -> (i32, i32) {
    %c0_i32 = arith.constant 0 : i32
    %c0_i32_0 = arith.constant 0 : i32
    %c0_i32_1 = arith.constant 0 : i32
    return %c0_i32, %c0_i32_0 : i32, i32
  }
  func.func @transform_2(%arg0: i32) -> (i32, i32, i32) {
    %c0_i32 = arith.constant 0 : i32
    %c0_i32_0 = arith.constant 0 : i32
    %c0_i32_1 = arith.constant 0 : i32
    %c0_i32_2 = arith.constant 0 : i32
    return %c0_i32, %c0_i32_0, %c0_i32_1 : i32, i32, i32
  }
  func.func @transform_3(%arg0: i32) -> (i32, i32) {
    %c0_i32 = arith.constant 0 : i32
    %c0_i32_0 = arith.constant 0 : i32
    %c0_i32_1 = arith.constant 0 : i32
    return %c0_i32, %c0_i32_0 : i32, i32
  }
  func.func @transform_4(%arg0: i32) -> (i32, i32) {
    %c0_i32 = arith.constant 0 : i32
    %c0_i32_0 = arith.constant 0 : i32
    return %c0_i32, %arg0 : i32, i32
  }
}

</mosaic_0001>

<llo_original>
// kernel: tpu_custom_call.1
$region0: #{tpu_custom_call.1}
  #allocation0 [shape = 'u32[]', space=smem, size = 0x4, offset = 0x4, fixed_abs, tag = 'smem constant byte address 0x4 - core index']
  #allocation1 [shape = 'u32[144,128]{1,0:T(1,128)}', space=vmem, size = 0x12000, scoped, tag = 'internal scratch']
  %s0 = inlined_call_operand.vmem [shape: f32[8,1024], index: 0, kind: input, shape index: {}]
  %s1 = inlined_call_operand.vmem [shape: f32[64,8], index: 1, kind: input, shape index: {}]
  %s2 = inlined_call_operand.hbm [shape: bf16[2,64,64], index: 2, kind: input, shape index: {}]
  %s3 = inlined_call_operand.vmem [shape: bf16[8,64], index: 3, kind: input, shape index: {}]
  %s4 = inlined_call_operand.hbm [shape: f32[8,1024], index: 4, kind: output, shape index: {}]
  %s5 = sld [smem:[#allocation0]]
  $region53: #{tpu_custom_call.1} parent=0
    _
  %s7 = ssub.s32 1, %s5
  %s8 = scalar_select 0, %s7, %s5
  $region1: #{tpu_custom_call.1} parent=0
    #allocation2 [shape = 'u8[32768]{0}', space=vmem, size = 0x8000, scoped, tag = 'input window, operand 2, single buffered']
    #allocation3 [shape = 's32[2]{0}', space=sflag, size = 0x8, scoped, tag = 'scoped memory for tpu_custom_call.1']
    #allocation4 [shape = 's32[2]{0}', space=sflag, size = 0x8, scoped, tag = 'scoped memory for tpu_custom_call.1']
    #allocation5 [shape = 'u8[32768]{0}', space=vmem, size = 0x8000, scoped, tag = 'output window, operand 0']
    %9 = vsyncpa [#allocation3], 0
    %10 = vsyncpa [#allocation4], 0
    %s11 = scalar_lea.sflag [#allocation4], 1
    %12 = vsyncpa %s11, 0
    loop: start=0, step=1, limit=4
    $region2: #{tpu_custom_call.1} parent=1 // loop_pre_header
      _
    $region3: #{tpu_custom_call.1} parent=1 // loop_header
      %s14 = sphi 0, %s18
      %p15 = scmp.ge.s32.totalorder %s14, 4
      %s24 = sphi 0, %s26
      %s27 = sphi 0, %s24
      %s28 = sphi 0, %s27
      %s44 = sphi 0, %s28
      %s48 = sphi 0, %s48
      %s50 = sphi 0, %s48
      %s51 = sphi 0, %s50
      %s65 = sphi 0, %s51
      %s69 = sphi 0, %s69
      %s71 = sphi 0, %s69
      %s72 = sphi 0, %s71
      %s86 = sphi 0, %s72
      %s90 = sphi 0, %s90
      %s92 = sphi 0, %s90
      %s93 = sphi 0, %s92
      %s107 = sphi 0, %s93
      %s113 = sphi 0, %s115
      %s116 = sphi 0, %s113
      %s117 = sphi 0, %s116
      %s133 = sphi 0, %s117
    $region4: #{tpu_custom_call.1} parent=1 // loop_header_branch
      %17 = sbr.rel (%p15) target = $region8
    $region5: #{tpu_custom_call.1} parent=1 // loop_body
      %s19 = ssub.s32 %s14, 1
      %s20 = ssub.s32 %s14, 2
      %s21 = sadd.s32 %s14, 1
      %s22 = ssub.s32 %s14, %s21
      %p23 = scmp.eq.s32.totalorder %s22, 0
      %s25 = sadd.s32 %s24, 1
      %s26 = scalar_select %p23, %s24, %s25
      %p29 = pneg %p23
      %p30 = scmp.eq.s32.totalorder %s14, 1
      %p31 = por %p29, %p30
      %p32 = scmp.ne.s32.totalorder %s24, %s27
      %p33 = scmp.eq.s32.totalorder %s14, 0
      %p34 = por %p32, %p33
      %p35 = scmp.ne.s32.totalorder %s24, %s27
      %p36 = scmp.eq.s32.totalorder %s19, 1
      %p37 = por %p35, %p36
      %p38 = scmp.ne.s32.totalorder %s27, %s28
      %p39 = scmp.eq.s32.totalorder %s19, 0
      %p40 = por %p38, %p39
      %p41 = scmp.ne.s32.totalorder %s27, %s28
      %p42 = scmp.eq.s32.totalorder %s20, 1
      %p43 = por %p41, %p42
      %p45 = scmp.ne.s32.totalorder %s28, %s44
      %p46 = scmp.eq.s32.totalorder %s20, 0
      %p47 = por %p45, %p46
      %s49 = sadd.s32 %s48, 1
      %p52 = scmp.eq.s32.totalorder %s14, 1
      %p53 = scmp.ne.s32.totalorder %s48, %s50
      %p54 = scmp.eq.s32.totalorder %s14, 0
      %p55 = por %p53, %p54
      %p56 = scmp.ne.s32.totalorder %s48, %s50
      %p57 = scmp.eq.s32.totalorder %s19, 1
      %p58 = por %p56, %p57
      %p59 = scmp.ne.s32.totalorder %s50, %s51
      %p60 = scmp.eq.s32.totalorder %s19, 0
      %p61 = por %p59, %p60
      %p62 = scmp.ne.s32.totalorder %s50, %s51
      %p63 = scmp.eq.s32.totalorder %s20, 1
      %p64 = por %p62, %p63
      %p66 = scmp.ne.s32.totalorder %s51, %s65
      %p67 = scmp.eq.s32.totalorder %s20, 0
      %p68 = por %p66, %p67
      %s70 = sadd.s32 %s69, 1
      %p73 = scmp.eq.s32.totalorder %s14, 1
      %p74 = scmp.ne.s32.totalorder %s69, %s71
      %p75 = scmp.eq.s32.totalorder %s14, 0
      %p76 = por %p74, %p75
      %p77 = scmp.ne.s32.totalorder %s69, %s71
      %p78 = scmp.eq.s32.totalorder %s19, 1
      %p79 = por %p77, %p78
      %p80 = scmp.ne.s32.totalorder %s71, %s72
      %p81 = scmp.eq.s32.totalorder %s19, 0
      %p82 = por %p80, %p81
      %p83 = scmp.ne.s32.totalorder %s71, %s72
      %p84 = scmp.eq.s32.totalorder %s20, 1
      %p85 = por %p83, %p84
      %p87 = scmp.ne.s32.totalorder %s72, %s86
      %p88 = scmp.eq.s32.totalorder %s20, 0
      %p89 = por %p87, %p88
      %s91 = sadd.s32 %s90, 1
      %p94 = scmp.eq.s32.totalorder %s14, 1
      %p95 = scmp.ne.s32.totalorder %s90, %s92
      %p96 = scmp.eq.s32.totalorder %s14, 0
      %p97 = por %p95, %p96
      %p98 = scmp.ne.s32.totalorder %s90, %s92
      %p99 = scmp.eq.s32.totalorder %s19, 1
      %p100 = por %p98, %p99
      %p101 = scmp.ne.s32.totalorder %s92, %s93
      %p102 = scmp.eq.s32.totalorder %s19, 0
      %p103 = por %p101, %p102
      %p104 = scmp.ne.s32.totalorder %s92, %s93
      %p105 = scmp.eq.s32.totalorder %s20, 1
      %p106 = por %p104, %p105
      %p108 = scmp.ne.s32.totalorder %s93, %s107
      %p109 = scmp.eq.s32.totalorder %s20, 0
      %p110 = por %p108, %p109
      %s111 = ssub.s32 %s14, %s21
      %p112 = scmp.eq.s32.totalorder %s111, 0
      %s114 = sadd.s32 %s113, 1
      %s115 = scalar_select %p112, %s113, %s114
      %p118 = pneg %p112
      %p119 = scmp.eq.s32.totalorder %s14, 1
      %p120 = por %p118, %p119
      %p121 = scmp.ne.s32.totalorder %s113, %s116
      %p122 = scmp.eq.s32.totalorder %s14, 0
      %p123 = por %p121, %p122
      %p124 = scmp.ne.s32.totalorder %s113, %s116
      %p125 = scmp.eq.s32.totalorder %s19, 1
      %p126 = por %p124, %p125
      %p127 = scmp.ne.s32.totalorder %s116, %s117
      %p128 = scmp.eq.s32.totalorder %s19, 0
      %p129 = por %p127, %p128
      %p130 = scmp.ne.s32.totalorder %s116, %s117
      %p131 = scmp.eq.s32.totalorder %s20, 1
      %p132 = por %p130, %p131
      %p134 = scmp.ne.s32.totalorder %s117, %s133
      %p135 = scmp.eq.s32.totalorder %s20, 0
      %p136 = por %p134, %p135
      %p137 = scmp.le.s32.totalorder 1, %s14
      %p138 = scmp.lt.s32.totalorder %s14, 3
      %p139 = pnand %p137, %p138
      %p140 = pneg %p139
      // Predicated region
      $region9: #{tpu_custom_call.1} parent=5 // pred_check
        _
      $region10: #{tpu_custom_call.1} parent=5 // pred_check_branch
        %142 = sbr.rel (%p139) target = $region12
      $region11: #{tpu_custom_call.1} parent=5 // pred_region
        %s143 = ssub.s32 %s14, 1
        // Predicated region
        $region13: #{tpu_custom_call.1} parent=11 // pred_check
          %p144 = pneg %p61
        $region14: #{tpu_custom_call.1} parent=11 // pred_check_branch
          %146 = sbr.rel (%p144) target = $region16
        $region15: #{tpu_custom_call.1} parent=11 // pred_region
          _
        $region16: #{tpu_custom_call.1} parent=11 // pred_fallthru
          _
        // Predicated region
        $region17: #{tpu_custom_call.1} parent=11 // pred_check
          %p147 = pneg %p82
        $region18: #{tpu_custom_call.1} parent=11 // pred_check_branch
          %149 = sbr.rel (%p147) target = $region20
        $region19: #{tpu_custom_call.1} parent=11 // pred_region
          %s151 = ssub.s32 1024, 1024
          %152 = vsyncadd [#allocation3], %s151
          %s153 = sshll.u32 [#allocation2], 4
          %s154 = int_to_ptr.vmem [resolvable:$true] %s153
          %159 = dma.hbm_to_vmem [thread:$0]  %s2, 1024, %s154, [#allocation3], 64, 64, 4
        $region20: #{tpu_custom_call.1} parent=11 // pred_fallthru
          _
        // Predicated region
        $region21: #{tpu_custom_call.1} parent=11 // pred_check
          %p160 = pneg %p103
        $region22: #{tpu_custom_call.1} parent=11 // pred_check_branch
          %162 = sbr.rel (%p160) target = $region24
        $region23: #{tpu_custom_call.1} parent=11 // pred_region
          _
        $region24: #{tpu_custom_call.1} parent=11 // pred_fallthru
          _
      $region12: #{tpu_custom_call.1} parent=5 // pred_fallthru
        _
      %p163 = scmp.lt.s32.totalorder %s14, 2
      // Predicated region
      $region25: #{tpu_custom_call.1} parent=5 // pred_check
        %p164 = pneg %p163
      $region26: #{tpu_custom_call.1} parent=5 // pred_check_branch
        %166 = sbr.rel (%p164) target = $region28
      $region27: #{tpu_custom_call.1} parent=5 // pred_region
        // Predicated region
        $region29: #{tpu_custom_call.1} parent=27 // pred_check
          %p167 = pneg %p34
        $region30: #{tpu_custom_call.1} parent=27 // pred_check_branch
          %169 = sbr.rel (%p167) target = $region32
        $region31: #{tpu_custom_call.1} parent=27 // pred_region
          %s170 = smul.u32 4, %s14
          %p171 = scmp.lt.s32.totalorder %s170, 7
          %s172 = scalar_select %p171, %s170, 7
          %s173 = smul.addr %s172, 8
          %s174 = scalar_lea.vmem %s0, %s173
          %s175 = smul.u32 4, %s14
        $region32: #{tpu_custom_call.1} parent=27 // pred_fallthru
          _
      $region28: #{tpu_custom_call.1} parent=5 // pred_fallthru
        _
      %p176 = scmp.le.s32.totalorder 1, %s14
      %p177 = scmp.lt.s32.totalorder %s14, 3
      %p178 = pnand %p176, %p177
      %p179 = pneg %p178
      // Predicated region
      $region33: #{tpu_custom_call.1} parent=5 // pred_check
        _
      $region34: #{tpu_custom_call.1} parent=5 // pred_check_branch
        %181 = sbr.rel (%p178) target = $region36
      $region35: #{tpu_custom_call.1} parent=5 // pred_region
        %s182 = ssub.s32 %s14, 1
        // Predicated region
        $region37: #{tpu_custom_call.1} parent=35 // pred_check
          %p183 = pneg %p82
        $region38: #{tpu_custom_call.1} parent=35 // pred_check_branch
          %185 = sbr.rel (%p183) target = $region40
        $region39: #{tpu_custom_call.1} parent=35 // pred_region
          %186 = dma.done [#allocation3], 1024
        $region40: #{tpu_custom_call.1} parent=35 // pred_fallthru
          _
        %s187 = smul.u32 4, %s19
        %p188 = scmp.lt.s32.totalorder %s187, 7
        %s189 = scalar_select %p188, %s187, 7
        %s190 = smul.addr %s189, 8
        %s191 = scalar_lea.vmem %s0, %s190
        %p192 = pneg %p40
        %p193 = pneg %p37
        %p194 = pneg %p61
        %p195 = pneg %p58
        %p196 = pneg %p82
        %p197 = pneg %p79
        %p198 = pneg %p103
        %p199 = pneg %p100
        %p200 = pneg %p129
        %p201 = pneg %p126
        %s202 = sand.u32 %s116, 1
        %s203 = scalar_lea.sflag [#allocation4], %s202
        %s204 = sand.u32 %s116, 1
        %s205 = smul.addr %s204, 32
        %s206 = scalar_lea.vmem [#allocation5], %s205
        %s207 = smul.u32 4, %s19
        %p208 = scmp.lt.s32.totalorder %s207, 7
        %s209 = scalar_select %p208, %s207, 7
        %s210 = smul.addr %s209, 8
        %s211 = scalar_lea.vmem %s0, %s210
        %s212 = smul.u32 4, %s19
        %s213 = smul.u32 4, %s19
        %v215 = vld [vmem:[%s211] ss:$8 sm:$0xf]
        %s216 = scalar_lea.vmem %s211, 1
        %v217 = vld [vmem:[%s216] ss:$8 sm:$0xf]
        %s218 = scalar_lea.vmem %s211, 2
        %v219 = vld [vmem:[%s218] ss:$8 sm:$0xf]
        %v220 = vld [vmem:[%s1] sm:$0xff]
        %v221 = vld [vmem:[%s1 + $0x8] sm:$0xff]
        %v222 = vld [vmem:[%s1 + $0x10] sm:$0xff]
        %v223 = vld [vmem:[%s1 + $0x18] sm:$0xff]
        %v224 = vld [vmem:[%s1 + $0x20] sm:$0xff]
        %v225 = vld [vmem:[%s1 + $0x28] sm:$0xff]
        %v226 = vld [vmem:[%s1 + $0x30] sm:$0xff]
        %v227 = vld [vmem:[%s1 + $0x38] sm:$0xff]
        %229 = vset.pattern.permute.xlu0 0
        %230 = vperm.xlu0 %229, %v220
        %v231 = vpop.permute.xlu0 %230
        %234 = vset.pattern.permute.xlu0 0
        %235 = vperm.xlu0 %234, %v221
        %v236 = vpop.permute.xlu0 %235
        %239 = vset.pattern.permute.xlu0 0
        %240 = vperm.xlu0 %239, %v222
        %v241 = vpop.permute.xlu0 %240
        %244 = vset.pattern.permute.xlu0 0
        %245 = vperm.xlu0 %244, %v223
        %v246 = vpop.permute.xlu0 %245
        %249 = vset.pattern.permute.xlu0 0
        %250 = vperm.xlu0 %249, %v224
        %v251 = vpop.permute.xlu0 %250
        %254 = vset.pattern.permute.xlu0 0
        %255 = vperm.xlu0 %254, %v225
        %v256 = vpop.permute.xlu0 %255
        %259 = vset.pattern.permute.xlu0 0
        %260 = vperm.xlu0 %259, %v226
        %v261 = vpop.permute.xlu0 %260
        %264 = vset.pattern.permute.xlu0 0
        %265 = vperm.xlu0 %264, %v227
        %v266 = vpop.permute.xlu0 %265
        %v269 = vlaneseq
        %v270 = vshrl.u32 %v269, 7
        %v271 = vsub.s32 0, %v270
        %v272 = vrot.slane %v215, %v271
        %v273 = vlaneseq
        %v274 = vshrl.u32 %v273, 7
        %v275 = vsub.s32 1, %v274
        %v276 = vrot.slane %v215, %v275
        %v277 = vlaneseq
        %v278 = vshrl.u32 %v277, 7
        %v279 = vsub.s32 2, %v278
        %v280 = vrot.slane %v215, %v279
        %v281 = vlaneseq
        %v282 = vshrl.u32 %v281, 7
        %v283 = vsub.s32 3, %v282
        %v284 = vrot.slane %v215, %v283
        %v289 = vmul.f32 %v231, %v272
        %v290 = vmul.f32 %v231, %v276
        %v291 = vmul.f32 %v231, %v280
        %v292 = vmul.f32 %v231, %v284
        %v293 = vmul.f32 %v236, %v272
        %v294 = vmul.f32 %v236, %v276
        %v295 = vmul.f32 %v236, %v280
        %v296 = vmul.f32 %v236, %v284
        %v297 = vmul.f32 %v241, %v272
        %v298 = vmul.f32 %v241, %v276
        %v299 = vmul.f32 %v241, %v280
        %v300 = vmul.f32 %v241, %v284
        %v301 = vmul.f32 %v246, %v272
        %v302 = vmul.f32 %v246, %v276
        %v303 = vmul.f32 %v246, %v280
        %v304 = vmul.f32 %v246, %v284
        %v305 = vmul.f32 %v251, %v272
        %v306 = vmul.f32 %v251, %v276
        %v307 = vmul.f32 %v251, %v280
        %v308 = vmul.f32 %v251, %v284
        %v309 = vmul.f32 %v256, %v272
        %v310 = vmul.f32 %v256, %v276
        %v311 = vmul.f32 %v256, %v280
        %v312 = vmul.f32 %v256, %v284
        %v313 = vmul.f32 %v261, %v272
        %v314 = vmul.f32 %v261, %v276
        %v315 = vmul.f32 %v261, %v280
        %v316 = vmul.f32 %v261, %v284
        %v317 = vmul.f32 %v266, %v272
        %v318 = vmul.f32 %v266, %v276
        %v319 = vmul.f32 %v266, %v280
        %v320 = vmul.f32 %v266, %v284
        %321 = vset.pattern.permute.xlu0 1
        %322 = vperm.xlu0 %321, %v220
        %v323 = vpop.permute.xlu0 %322
        %325 = vset.pattern.permute.xlu0 1
        %326 = vperm.xlu0 %325, %v221
        %v327 = vpop.permute.xlu0 %326
        %329 = vset.pattern.permute.xlu0 1
        %330 = vperm.xlu0 %329, %v222
        %v331 = vpop.permute.xlu0 %330
        %333 = vset.pattern.permute.xlu0 1
        %334 = vperm.xlu0 %333, %v223
        %v335 = vpop.permute.xlu0 %334
        %337 = vset.pattern.permute.xlu0 1
        %338 = vperm.xlu0 %337, %v224
        %v339 = vpop.permute.xlu0 %338
        %341 = vset.pattern.permute.xlu0 1
        %342 = vperm.xlu0 %341, %v225
        %v343 = vpop.permute.xlu0 %342
        %345 = vset.pattern.permute.xlu0 1
        %346 = vperm.xlu0 %345, %v226
        %v347 = vpop.permute.xlu0 %346
        %349 = vset.pattern.permute.xlu0 1
        %350 = vperm.xlu0 %349, %v227
        %v351 = vpop.permute.xlu0 %350
        %v354 = vlaneseq
        %v355 = vshrl.u32 %v354, 7
        %v356 = vsub.s32 0, %v355
        %v357 = vrot.slane %v217, %v356
        %v358 = vlaneseq
        %v359 = vshrl.u32 %v358, 7
        %v360 = vsub.s32 1, %v359
        %v361 = vrot.slane %v217, %v360
        %v362 = vlaneseq
        %v363 = vshrl.u32 %v362, 7
        %v364 = vsub.s32 2, %v363
        %v365 = vrot.slane %v217, %v364
        %v366 = vlaneseq
        %v367 = vshrl.u32 %v366, 7
        %v368 = vsub.s32 3, %v367
        %v369 = vrot.slane %v217, %v368
        %v374 = vmul.f32 %v323, %v357
        %v375 = vmul.f32 %v323, %v361
        %v376 = vmul.f32 %v323, %v365
        %v377 = vmul.f32 %v323, %v369
        %v378 = vmul.f32 %v327, %v357
        %v379 = vmul.f32 %v327, %v361
        %v380 = vmul.f32 %v327, %v365
        %v381 = vmul.f32 %v327, %v369
        %v382 = vmul.f32 %v331, %v357
        %v383 = vmul.f32 %v331, %v361
        %v384 = vmul.f32 %v331, %v365
        %v385 = vmul.f32 %v331, %v369
        %v386 = vmul.f32 %v335, %v357
        %v387 = vmul.f32 %v335, %v361
        %v388 = vmul.f32 %v335, %v365
        %v389 = vmul.f32 %v335, %v369
        %v390 = vmul.f32 %v339, %v357
        %v391 = vmul.f32 %v339, %v361
        %v392 = vmul.f32 %v339, %v365
        %v393 = vmul.f32 %v339, %v369
        %v394 = vmul.f32 %v343, %v357
        %v395 = vmul.f32 %v343, %v361
        %v396 = vmul.f32 %v343, %v365
        %v397 = vmul.f32 %v343, %v369
        %v398 = vmul.f32 %v347, %v357
        %v399 = vmul.f32 %v347, %v361
        %v400 = vmul.f32 %v347, %v365
        %v401 = vmul.f32 %v347, %v369
        %v402 = vmul.f32 %v351, %v357
        %v403 = vmul.f32 %v351, %v361
        %v404 = vmul.f32 %v351, %v365
        %v405 = vmul.f32 %v351, %v369
        %v406 = vadd.f32 %v289, %v374
        %v407 = vadd.f32 %v290, %v375
        %v408 = vadd.f32 %v291, %v376
        %v409 = vadd.f32 %v292, %v377
        %v410 = vadd.f32 %v293, %v378
        %v411 = vadd.f32 %v294, %v379
        %v412 = vadd.f32 %v295, %v380
        %v413 = vadd.f32 %v296, %v381
        %v414 = vadd.f32 %v297, %v382
        %v415 = vadd.f32 %v298, %v383
        %v416 = vadd.f32 %v299, %v384
        %v417 = vadd.f32 %v300, %v385
        %v418 = vadd.f32 %v301, %v386
        %v419 = vadd.f32 %v302, %v387
        %v420 = vadd.f32 %v303, %v388
        %v421 = vadd.f32 %v304, %v389
        %v422 = vadd.f32 %v305, %v390
        %v423 = vadd.f32 %v306, %v391
        %v424 = vadd.f32 %v307, %v392
        %v425 = vadd.f32 %v308, %v393
        %v426 = vadd.f32 %v309, %v394
        %v427 = vadd.f32 %v310, %v395
        %v428 = vadd.f32 %v311, %v396
        %v429 = vadd.f32 %v312, %v397
        %v430 = vadd.f32 %v313, %v398
        %v431 = vadd.f32 %v314, %v399
        %v432 = vadd.f32 %v315, %v400
        %v433 = vadd.f32 %v316, %v401
        %v434 = vadd.f32 %v317, %v402
        %v435 = vadd.f32 %v318, %v403
        %v436 = vadd.f32 %v319, %v404
        %v437 = vadd.f32 %v320, %v405
        %438 = vset.pattern.permute.xlu0 2
        %439 = vperm.xlu0 %438, %v220
        %v440 = vpop.permute.xlu0 %439
        %442 = vset.pattern.permute.xlu0 2
        %443 = vperm.xlu0 %442, %v221
        %v444 = vpop.permute.xlu0 %443
        %446 = vset.pattern.permute.xlu0 2
        %447 = vperm.xlu0 %446, %v222
        %v448 = vpop.permute.xlu0 %447
        %450 = vset.pattern.permute.xlu0 2
        %451 = vperm.xlu0 %450, %v223
        %v452 = vpop.permute.xlu0 %451
        %454 = vset.pattern.permute.xlu0 2
        %455 = vperm.xlu0 %454, %v224
        %v456 = vpop.permute.xlu0 %455
        %458 = vset.pattern.permute.xlu0 2
        %459 = vperm.xlu0 %458, %v225
        %v460 = vpop.permute.xlu0 %459
        %462 = vset.pattern.permute.xlu0 2
        %463 = vperm.xlu0 %462, %v226
        %v464 = vpop.permute.xlu0 %463
        %466 = vset.pattern.permute.xlu0 2
        %467 = vperm.xlu0 %466, %v227
        %v468 = vpop.permute.xlu0 %467
        %v471 = vlaneseq
        %v472 = vshrl.u32 %v471, 7
        %v473 = vsub.s32 0, %v472
        %v474 = vrot.slane %v219, %v473
        %v475 = vlaneseq
        %v476 = vshrl.u32 %v475, 7
        %v477 = vsub.s32 1, %v476
        %v478 = vrot.slane %v219, %v477
        %v479 = vlaneseq
        %v480 = vshrl.u32 %v479, 7
        %v481 = vsub.s32 2, %v480
        %v482 = vrot.slane %v219, %v481
        %v483 = vlaneseq
        %v484 = vshrl.u32 %v483, 7
        %v485 = vsub.s32 3, %v484
        %v486 = vrot.slane %v219, %v485
        %v491 = vmul.f32 %v440, %v474
        %v492 = vmul.f32 %v440, %v478
        %v493 = vmul.f32 %v440, %v482
        %v494 = vmul.f32 %v440, %v486
        %v495 = vmul.f32 %v444, %v474
        %v496 = vmul.f32 %v444, %v478
        %v497 = vmul.f32 %v444, %v482
        %v498 = vmul.f32 %v444, %v486
        %v499 = vmul.f32 %v448, %v474
        %v500 = vmul.f32 %v448, %v478
        %v501 = vmul.f32 %v448, %v482
        %v502 = vmul.f32 %v448, %v486
        %v503 = vmul.f32 %v452, %v474
        %v504 = vmul.f32 %v452, %v478
        %v505 = vmul.f32 %v452, %v482
        %v506 = vmul.f32 %v452, %v486
        %v507 = vmul.f32 %v456, %v474
        %v508 = vmul.f32 %v456, %v478
        %v509 = vmul.f32 %v456, %v482
        %v510 = vmul.f32 %v456, %v486
        %v511 = vmul.f32 %v460, %v474
        %v512 = vmul.f32 %v460, %v478
        %v513 = vmul.f32 %v460, %v482
        %v514 = vmul.f32 %v460, %v486
        %v515 = vmul.f32 %v464, %v474
        %v516 = vmul.f32 %v464, %v478
        %v517 = vmul.f32 %v464, %v482
        %v518 = vmul.f32 %v464, %v486
        %v519 = vmul.f32 %v468, %v474
        %v520 = vmul.f32 %v468, %v478
        %v521 = vmul.f32 %v468, %v482
        %v522 = vmul.f32 %v468, %v486
        %v523 = vadd.f32 %v406, %v491
        %v524 = vadd.f32 %v407, %v492
        %v525 = vadd.f32 %v408, %v493
        %v526 = vadd.f32 %v409, %v494
        %v527 = vadd.f32 %v410, %v495
        %v528 = vadd.f32 %v411, %v496
        %v529 = vadd.f32 %v412, %v497
        %v530 = vadd.f32 %v413, %v498
        %v531 = vadd.f32 %v414, %v499
        %v532 = vadd.f32 %v415, %v500
        %v533 = vadd.f32 %v416, %v501
        %v534 = vadd.f32 %v417, %v502
        %v535 = vadd.f32 %v418, %v503
        %v536 = vadd.f32 %v419, %v504
        %v537 = vadd.f32 %v420, %v505
        %v538 = vadd.f32 %v421, %v506
        %v539 = vadd.f32 %v422, %v507
        %v540 = vadd.f32 %v423, %v508
        %v541 = vadd.f32 %v424, %v509
        %v542 = vadd.f32 %v425, %v510
        %v543 = vadd.f32 %v426, %v511
        %v544 = vadd.f32 %v427, %v512
        %v545 = vadd.f32 %v428, %v513
        %v546 = vadd.f32 %v429, %v514
        %v547 = vadd.f32 %v430, %v515
        %v548 = vadd.f32 %v431, %v516
        %v549 = vadd.f32 %v432, %v517
        %v550 = vadd.f32 %v433, %v518
        %v551 = vadd.f32 %v434, %v519
        %v552 = vadd.f32 %v435, %v520
        %v553 = vadd.f32 %v436, %v521
        %v554 = vadd.f32 %v437, %v522
        %555 = vset.pattern.permute.xlu0 3
        %556 = vperm.xlu0 %555, %v220
        %v557 = vpop.permute.xlu0 %556
        %559 = vset.pattern.permute.xlu0 3
        %560 = vperm.xlu0 %559, %v221
        %v561 = vpop.permute.xlu0 %560
        %563 = vset.pattern.permute.xlu0 3
        %564 = vperm.xlu0 %563, %v222
        %v565 = vpop.permute.xlu0 %564
        %567 = vset.pattern.permute.xlu0 3
        %568 = vperm.xlu0 %567, %v223
        %v569 = vpop.permute.xlu0 %568
        %571 = vset.pattern.permute.xlu0 3
        %572 = vperm.xlu0 %571, %v224
        %v573 = vpop.permute.xlu0 %572
        %575 = vset.pattern.permute.xlu0 3
        %576 = vperm.xlu0 %575, %v225
        %v577 = vpop.permute.xlu0 %576
        %579 = vset.pattern.permute.xlu0 3
        %580 = vperm.xlu0 %579, %v226
        %v581 = vpop.permute.xlu0 %580
        %583 = vset.pattern.permute.xlu0 3
        %584 = vperm.xlu0 %583, %v227
        %v585 = vpop.permute.xlu0 %584
        %v587 = vadd.f32 %v523, %v557
        %v588 = vadd.f32 %v524, %v557
        %v589 = vadd.f32 %v525, %v557
        %v590 = vadd.f32 %v526, %v557
        %v591 = vadd.f32 %v527, %v561
        %v592 = vadd.f32 %v528, %v561
        %v593 = vadd.f32 %v529, %v561
        %v594 = vadd.f32 %v530, %v561
        %v595 = vadd.f32 %v531, %v565
        %v596 = vadd.f32 %v532, %v565
        %v597 = vadd.f32 %v533, %v565
        %v598 = vadd.f32 %v534, %v565
        %v599 = vadd.f32 %v535, %v569
        %v600 = vadd.f32 %v536, %v569
        %v601 = vadd.f32 %v537, %v569
        %v602 = vadd.f32 %v538, %v569
        %v603 = vadd.f32 %v539, %v573
        %v604 = vadd.f32 %v540, %v573
        %v605 = vadd.f32 %v541, %v573
        %v606 = vadd.f32 %v542, %v573
        %v607 = vadd.f32 %v543, %v577
        %v608 = vadd.f32 %v544, %v577
        %v609 = vadd.f32 %v545, %v577
        %v610 = vadd.f32 %v546, %v577
        %v611 = vadd.f32 %v547, %v581
        %v612 = vadd.f32 %v548, %v581
        %v613 = vadd.f32 %v549, %v581
        %v614 = vadd.f32 %v550, %v581
        %v615 = vadd.f32 %v551, %v585
        %v616 = vadd.f32 %v552, %v585
        %v617 = vadd.f32 %v553, %v585
        %v618 = vadd.f32 %v554, %v585
        %v619 = vpack.c.bf16 %v591, %v587
        %v620 = vpack.c.bf16 %v592, %v588
        %v621 = vpack.c.bf16 %v593, %v589
        %v622 = vpack.c.bf16 %v594, %v590
        %v623 = vpack.c.bf16 %v599, %v595
        %v624 = vpack.c.bf16 %v600, %v596
        %v625 = vpack.c.bf16 %v601, %v597
        %v626 = vpack.c.bf16 %v602, %v598
        %v627 = vpack.c.bf16 %v607, %v603
        %v628 = vpack.c.bf16 %v608, %v604
        %v629 = vpack.c.bf16 %v609, %v605
        %v630 = vpack.c.bf16 %v610, %v606
        %v631 = vpack.c.bf16 %v615, %v611
        %v632 = vpack.c.bf16 %v616, %v612
        %v633 = vpack.c.bf16 %v617, %v613
        %v634 = vpack.c.bf16 %v618, %v614
        %v635 = vtanh.bf16.pop %v619
        %v636 = vtanh.bf16.pop %v620
        %v637 = vtanh.bf16.pop %v621
        %v638 = vtanh.bf16.pop %v622
        %v639 = vtanh.bf16.pop %v623
        %v640 = vtanh.bf16.pop %v624
        %v641 = vtanh.bf16.pop %v625
        %v642 = vtanh.bf16.pop %v626
        %v643 = vtanh.bf16.pop %v627
        %v644 = vtanh.bf16.pop %v628
        %v645 = vtanh.bf16.pop %v629
        %v646 = vtanh.bf16.pop %v630
        %v647 = vtanh.bf16.pop %v631
        %v648 = vtanh.bf16.pop %v632
        %v649 = vtanh.bf16.pop %v633
        %v650 = vtanh.bf16.pop %v634
        %v651 = vld [vmem:[#allocation2] sm:$0xf]
        %v652 = vld [vmem:[#allocation2 + $0x4] sm:$0xf]
        %v653 = vld [vmem:[#allocation2 + $0x8] sm:$0xf]
        %v654 = vld [vmem:[#allocation2 + $0xc] sm:$0xf]
        %v655 = vld [vmem:[#allocation2 + $0x10] sm:$0xf]
        %v656 = vld [vmem:[#allocation2 + $0x14] sm:$0xf]
        %v657 = vld [vmem:[#allocation2 + $0x18] sm:$0xf]
        %v658 = vld [vmem:[#allocation2 + $0x1c] sm:$0xf]
        %659 = vset.pattern.permute.xlu0 4
        %660 = vperm.xlu0 %659, %v220
        %v661 = vpop.permute.xlu0 %660
        %663 = vset.pattern.permute.xlu0 4
        %664 = vperm.xlu0 %663, %v221
        %v665 = vpop.permute.xlu0 %664
        %667 = vset.pattern.permute.xlu0 4
        %668 = vperm.xlu0 %667, %v222
        %v669 = vpop.permute.xlu0 %668
        %671 = vset.pattern.permute.xlu0 4
        %672 = vperm.xlu0 %671, %v223
        %v673 = vpop.permute.xlu0 %672
        %675 = vset.pattern.permute.xlu0 4
        %676 = vperm.xlu0 %675, %v224
        %v677 = vpop.permute.xlu0 %676
        %679 = vset.pattern.permute.xlu0 4
        %680 = vperm.xlu0 %679, %v225
        %v681 = vpop.permute.xlu0 %680
        %683 = vset.pattern.permute.xlu0 4
        %684 = vperm.xlu0 %683, %v226
        %v685 = vpop.permute.xlu0 %684
        %687 = vset.pattern.permute.xlu0 4
        %688 = vperm.xlu0 %687, %v227
        %v689 = vpop.permute.xlu0 %688
        %v699 = vunpack.c.l.b16 %v651
        %v700 = vunpack.c.l.b16 %v652
        %v701 = vunpack.c.l.b16 %v653
        %v702 = vunpack.c.l.b16 %v654
        %v703 = vunpack.c.l.b16 %v655
        %v704 = vunpack.c.l.b16 %v656
        %v705 = vunpack.c.l.b16 %v657
        %v706 = vunpack.c.l.b16 %v658
        %v707 = vpack.c.b16 %v700, %v699
        %v708 = vpack.c.b16 %v702, %v701
        %v709 = vpack.c.b16 %v704, %v703
        %v710 = vpack.c.b16 %v706, %v705
        %vm711 = vcmask 523264
        %v713 = vsel %vm711, %v707, 0
        %v716 = vsel %vm711, %v708, 0
        %v719 = vsel %vm711, %v709, 0
        %v722 = vsel %vm711, %v710, 0
        %724 = vmatprep.subr.bf16.mxu0 %v636
        %725 = vmatpush1.bf16.msra.mxu0 %v635
        %726 = vmatprep.subr.bf16.mxu0 %v640
        %727 = vmatpush1.bf16.msra.mxu0 %v639
        %728 = vmatprep.subr.bf16.mxu0 %v644
        %729 = vmatpush1.bf16.msra.mxu0 %v643
        %730 = vmatprep.subr.bf16.mxu0 %v648
        %731 = vmatpush1.bf16.msra.mxu0 %v647
        %732 = vmatprep.subr.bf16.mxu0 0
        %733 = vmatpush1.bf16.msra.mxu0 0
        %734 = vmatprep.subr.bf16.mxu0 0
        %735 = vmatpush1.bf16.msra.mxu0 0
        %736 = vmatprep.subr.bf16.mxu0 0
        %737 = vmatpush1.bf16.msra.mxu0 0
        %738 = vmatprep.subr.bf16.mxu0 0
        %739 = vmatpush1.bf16.msra.mxu0 0
        %740 = vmatprep.subr.bf16.mxu0 0
        %741 = vmatpush1.bf16.msra.mxu0 0
        %742 = vmatprep.subr.bf16.mxu0 0
        %743 = vmatpush1.bf16.msra.mxu0 0
        %744 = vmatprep.subr.bf16.mxu0 0
        %745 = vmatpush1.bf16.msra.mxu0 0
        %746 = vmatprep.subr.bf16.mxu0 0
        %747 = vmatpush1.bf16.msra.mxu0 0
        %748 = vmatprep.subr.bf16.mxu0 0
        %749 = vmatpush1.bf16.msra.mxu0 0
        %750 = vmatprep.subr.bf16.mxu0 0
        %751 = vmatpush1.bf16.msra.mxu0 0
        %752 = vmatprep.subr.bf16.mxu0 0
        %753 = vmatpush1.bf16.msra.mxu0 0
        %754 = vmatprep.subr.bf16.mxu0 0
        %755 = vmatpush1.bf16.msra.mxu0 0
        %756 = vmatprep.mubr.bf16.mxu0 0
        %757 = vmatmul.mubr.bf16.gmra.mrb[0].mxu0 %v713
        %v758 = vpop.f32.mrb[0].mxu0
        %v759 = vadd.f32 %v661, %v758
        %v760 = vpop.f32.mrb[0].mxu0
        %v761 = vadd.f32 %v661, %v760
        %v762 = vpop.f32.mrb[0].mxu0
        %v763 = vadd.f32 %v665, %v762
        %v764 = vpop.f32.mrb[0].mxu0
        %v765 = vadd.f32 %v665, %v764
        %766 = vmatprep.mubr.bf16.mxu0 0
        %767 = vmatmul.mubr.bf16.gmra.mrb[0].mxu0 %v716
        %v768 = vpop.f32.mrb[0].mxu0
        %v769 = vadd.f32 %v669, %v768
        %v770 = vpop.f32.mrb[0].mxu0
        %v771 = vadd.f32 %v669, %v770
        %v772 = vpop.f32.mrb[0].mxu0
        %v773 = vadd.f32 %v673, %v772
        %v774 = vpop.f32.mrb[0].mxu0
        %v775 = vadd.f32 %v673, %v774
        %776 = vmatprep.mubr.bf16.mxu0 0
        %777 = vmatmul.mubr.bf16.gmra.mrb[0].mxu0 %v719
        %v778 = vpop.f32.mrb[0].mxu0
        %v779 = vadd.f32 %v677, %v778
        %v780 = vpop.f32.mrb[0].mxu0
        %v781 = vadd.f32 %v677, %v780
        %v782 = vpop.f32.mrb[0].mxu0
        %v783 = vadd.f32 %v681, %v782
        %v784 = vpop.f32.mrb[0].mxu0
        %v785 = vadd.f32 %v681, %v784
        %786 = vmatprep.mubr.bf16.mxu0 0
        %787 = vmatmul.mubr.bf16.gmra.mrb[0].mxu0 %v722
        %v788 = vpop.f32.mrb[0].mxu0
        %v789 = vadd.f32 %v685, %v788
        %v790 = vpop.f32.mrb[0].mxu0
        %v791 = vadd.f32 %v685, %v790
        %v792 = vpop.f32.mrb[0].mxu0
        %v793 = vadd.f32 %v689, %v792
        %v794 = vpop.f32.mrb[0].mxu0
        %v795 = vadd.f32 %v689, %v794
        %796 = vdwg.mxu0
        %797 = vmatprep.subr.bf16.mxu0 %v638
        %798 = vmatpush1.bf16.msra.mxu0 %v637
        %799 = vmatprep.subr.bf16.mxu0 %v642
        %800 = vmatpush1.bf16.msra.mxu0 %v641
        %801 = vmatprep.subr.bf16.mxu0 %v646
        %802 = vmatpush1.bf16.msra.mxu0 %v645
        %803 = vmatprep.subr.bf16.mxu0 %v650
        %804 = vmatpush1.bf16.msra.mxu0 %v649
        %805 = vmatprep.subr.bf16.mxu0 0
        %806 = vmatpush1.bf16.msra.mxu0 0
        %807 = vmatprep.subr.bf16.mxu0 0
        %808 = vmatpush1.bf16.msra.mxu0 0
        %809 = vmatprep.subr.bf16.mxu0 0
        %810 = vmatpush1.bf16.msra.mxu0 0
        %811 = vmatprep.subr.bf16.mxu0 0
        %812 = vmatpush1.bf16.msra.mxu0 0
        %813 = vmatprep.subr.bf16.mxu0 0
        %814 = vmatpush1.bf16.msra.mxu0 0
        %815 = vmatprep.subr.bf16.mxu0 0
        %816 = vmatpush1.bf16.msra.mxu0 0
        %817 = vmatprep.subr.bf16.mxu0 0
        %818 = vmatpush1.bf16.msra.mxu0 0
        %819 = vmatprep.subr.bf16.mxu0 0
        %820 = vmatpush1.bf16.msra.mxu0 0
        %821 = vmatprep.subr.bf16.mxu0 0
        %822 = vmatpush1.bf16.msra.mxu0 0
        %823 = vmatprep.subr.bf16.mxu0 0
        %824 = vmatpush1.bf16.msra.mxu0 0
        %825 = vmatprep.subr.bf16.mxu0 0
        %826 = vmatpush1.bf16.msra.mxu0 0
        %827 = vmatprep.subr.bf16.mxu0 0
        %828 = vmatpush1.bf16.msra.mxu0 0
        %829 = vmatprep.mubr.bf16.mxu0 0
        %830 = vmatmul.mubr.bf16.gmra.mrb[0].mxu0 %v713
        %v831 = vpop.f32.mrb[0].mxu0
        %v832 = vadd.f32 %v661, %v831
        %v833 = vpop.f32.mrb[0].mxu0
        %v834 = vadd.f32 %v661, %v833
        %v835 = vpop.f32.mrb[0].mxu0
        %v836 = vadd.f32 %v665, %v835
        %v837 = vpop.f32.mrb[0].mxu0
        %v838 = vadd.f32 %v665, %v837
        %839 = vmatprep.mubr.bf16.mxu0 0
        %840 = vmatmul.mubr.bf16.gmra.mrb[0].mxu0 %v716
        %v841 = vpop.f32.mrb[0].mxu0
        %v842 = vadd.f32 %v669, %v841
        %v843 = vpop.f32.mrb[0].mxu0
        %v844 = vadd.f32 %v669, %v843
        %v845 = vpop.f32.mrb[0].mxu0
        %v846 = vadd.f32 %v673, %v845
        %v847 = vpop.f32.mrb[0].mxu0
        %v848 = vadd.f32 %v673, %v847
        %849 = vmatprep.mubr.bf16.mxu0 0
        %850 = vmatmul.mubr.bf16.gmra.mrb[0].mxu0 %v719
        %v851 = vpop.f32.mrb[0].mxu0
        %v852 = vadd.f32 %v677, %v851
        %v853 = vpop.f32.mrb[0].mxu0
        %v854 = vadd.f32 %v677, %v853
        %v855 = vpop.f32.mrb[0].mxu0
        %v856 = vadd.f32 %v681, %v855
        %v857 = vpop.f32.mrb[0].mxu0
        %v858 = vadd.f32 %v681, %v857
        %859 = vmatprep.mubr.bf16.mxu0 0
        %860 = vmatmul.mubr.bf16.gmra.mrb[0].mxu0 %v722
        %v861 = vpop.f32.mrb[0].mxu0
        %v862 = vadd.f32 %v685, %v861
        %v863 = vpop.f32.mrb[0].mxu0
        %v864 = vadd.f32 %v685, %v863
        %v865 = vpop.f32.mrb[0].mxu0
        %v866 = vadd.f32 %v689, %v865
        %v867 = vpop.f32.mrb[0].mxu0
        %v868 = vadd.f32 %v689, %v867
        %869 = vdwg.mxu0
        %v870 = vpack.c.bf16 %v763, %v759
        %v871 = vpack.c.bf16 %v765, %v761
        %v872 = vpack.c.bf16 %v836, %v832
        %v873 = vpack.c.bf16 %v838, %v834
        %v874 = vpack.c.bf16 %v773, %v769
        %v875 = vpack.c.bf16 %v775, %v771
        %v876 = vpack.c.bf16 %v846, %v842
        %v877 = vpack.c.bf16 %v848, %v844
        %v878 = vpack.c.bf16 %v783, %v779
        %v879 = vpack.c.bf16 %v785, %v781
        %v880 = vpack.c.bf16 %v856, %v852
        %v881 = vpack.c.bf16 %v858, %v854
        %v882 = vpack.c.bf16 %v793, %v789
        %v883 = vpack.c.bf16 %v795, %v791
        %v884 = vpack.c.bf16 %v866, %v862
        %v885 = vpack.c.bf16 %v868, %v864
        %v886 = vtanh.bf16.pop %v870
        %v887 = vtanh.bf16.pop %v871
        %v888 = vtanh.bf16.pop %v872
        %v889 = vtanh.bf16.pop %v873
        %v890 = vtanh.bf16.pop %v874
        %v891 = vtanh.bf16.pop %v875
        %v892 = vtanh.bf16.pop %v876
        %v893 = vtanh.bf16.pop %v877
        %v894 = vtanh.bf16.pop %v878
        %v895 = vtanh.bf16.pop %v879
        %v896 = vtanh.bf16.pop %v880
        %v897 = vtanh.bf16.pop %v881
        %v898 = vtanh.bf16.pop %v882
        %v899 = vtanh.bf16.pop %v883
        %v900 = vtanh.bf16.pop %v884
        %v901 = vtanh.bf16.pop %v885
        %s902 = scalar_lea.vmem [#allocation2], 32
        %v903 = vld [vmem:[%s902] sm:$0xf]
        %v904 = vld [vmem:[%s902 + $0x4] sm:$0xf]
        %v905 = vld [vmem:[%s902 + $0x8] sm:$0xf]
        %v906 = vld [vmem:[%s902 + $0xc] sm:$0xf]
        %v907 = vld [vmem:[%s902 + $0x10] sm:$0xf]
        %v908 = vld [vmem:[%s902 + $0x14] sm:$0xf]
        %v909 = vld [vmem:[%s902 + $0x18] sm:$0xf]
        %v910 = vld [vmem:[%s902 + $0x1c] sm:$0xf]
        %911 = vset.pattern.permute.xlu0 5
        %912 = vperm.xlu0 %911, %v220
        %v913 = vpop.permute.xlu0 %912
        %915 = vset.pattern.permute.xlu0 5
        %916 = vperm.xlu0 %915, %v221
        %v917 = vpop.permute.xlu0 %916
        %919 = vset.pattern.permute.xlu0 5
        %920 = vperm.xlu0 %919, %v222
        %v921 = vpop.permute.xlu0 %920
        %923 = vset.pattern.permute.xlu0 5
        %924 = vperm.xlu0 %923, %v223
        %v925 = vpop.permute.xlu0 %924
        %927 = vset.pattern.permute.xlu0 5
        %928 = vperm.xlu0 %927, %v224
        %v929 = vpop.permute.xlu0 %928
        %931 = vset.pattern.permute.xlu0 5
        %932 = vperm.xlu0 %931, %v225
        %v933 = vpop.permute.xlu0 %932
        %935 = vset.pattern.permute.xlu0 5
        %936 = vperm.xlu0 %935, %v226
        %v937 = vpop.permute.xlu0 %936
        %939 = vset.pattern.permute.xlu0 5
        %940 = vperm.xlu0 %939, %v227
        %v941 = vpop.permute.xlu0 %940
        %v951 = vunpack.c.l.b16 %v903
        %v952 = vunpack.c.l.b16 %v904
        %v953 = vunpack.c.l.b16 %v905
        %v954 = vunpack.c.l.b16 %v906
        %v955 = vunpack.c.l.b16 %v907
        %v956 = vunpack.c.l.b16 %v908
        %v957 = vunpack.c.l.b16 %v909
        %v958 = vunpack.c.l.b16 %v910
        %v959 = vpack.c.b16 %v952, %v951
        %v960 = vpack.c.b16 %v954, %v953
        %v961 = vpack.c.b16 %v956, %v955
        %v962 = vpack.c.b16 %v958, %v957
        %v964 = vsel %vm711, %v959, 0
        %v967 = vsel %vm711, %v960, 0
        %v970 = vsel %vm711, %v961, 0
        %v973 = vsel %vm711, %v962, 0
        %975 = vmatprep.subr.bf16.mxu0 %v887
        %976 = vmatpush1.bf16.msra.mxu0 %v886
        %977 = vmatprep.subr.bf16.mxu0 %v891
        %978 = vmatpush1.bf16.msra.mxu0 %v890
        %979 = vmatprep.subr.bf16.mxu0 %v895
        %980 = vmatpush1.bf16.msra.mxu0 %v894
        %981 = vmatprep.subr.bf16.mxu0 %v899
        %982 = vmatpush1.bf16.msra.mxu0 %v898
        %983 = vmatprep.subr.bf16.mxu0 0
        %984 = vmatpush1.bf16.msra.mxu0 0
        %985 = vmatprep.subr.bf16.mxu0 0
        %986 = vmatpush1.bf16.msra.mxu0 0
        %987 = vmatprep.subr.bf16.mxu0 0
        %988 = vmatpush1.bf16.msra.mxu0 0
        %989 = vmatprep.subr.bf16.mxu0 0
        %990 = vmatpush1.bf16.msra.mxu0 0
        %991 = vmatprep.subr.bf16.mxu0 0
        %992 = vmatpush1.bf16.msra.mxu0 0
        %993 = vmatprep.subr.bf16.mxu0 0
        %994 = vmatpush1.bf16.msra.mxu0 0
        %995 = vmatprep.subr.bf16.mxu0 0
        %996 = vmatpush1.bf16.msra.mxu0 0
        %997 = vmatprep.subr.bf16.mxu0 0
        %998 = vmatpush1.bf16.msra.mxu0 0
        %999 = vmatprep.subr.bf16.mxu0 0
        %1000 = vmatpush1.bf16.msra.mxu0 0
        %1001 = vmatprep.subr.bf16.mxu0 0
        %1002 = vmatpush1.bf16.msra.mxu0 0
        %1003 = vmatprep.subr.bf16.mxu0 0
        %1004 = vmatpush1.bf16.msra.mxu0 0
        %1005 = vmatprep.subr.bf16.mxu0 0
        %1006 = vmatpush1.bf16.msra.mxu0 0
        %1007 = vmatprep.mubr.bf16.mxu0 0
        %1008 = vmatmul.mubr.bf16.gmra.mrb[0].mxu0 %v964
        %v1009 = vpop.f32.mrb[0].mxu0
        %v1010 = vadd.f32 %v913, %v1009
        %v1011 = vpop.f32.mrb[0].mxu0
        %v1012 = vadd.f32 %v913, %v1011
        %v1013 = vpop.f32.mrb[0].mxu0
        %v1014 = vadd.f32 %v917, %v1013
        %v1015 = vpop.f32.mrb[0].mxu0
        %v1016 = vadd.f32 %v917, %v1015
        %1017 = vmatprep.mubr.bf16.mxu0 0
        %1018 = vmatmul.mubr.bf16.gmra.mrb[0].mxu0 %v967
        %v1019 = vpop.f32.mrb[0].mxu0
        %v1020 = vadd.f32 %v921, %v1019
        %v1021 = vpop.f32.mrb[0].mxu0
        %v1022 = vadd.f32 %v921, %v1021
        %v1023 = vpop.f32.mrb[0].mxu0
        %v1024 = vadd.f32 %v925, %v1023
        %v1025 = vpop.f32.mrb[0].mxu0
        %v1026 = vadd.f32 %v925, %v1025
        %1027 = vmatprep.mubr.bf16.mxu0 0
        %1028 = vmatmul.mubr.bf16.gmra.mrb[0].mxu0 %v970
        %v1029 = vpop.f32.mrb[0].mxu0
        %v1030 = vadd.f32 %v929, %v1029
        %v1031 = vpop.f32.mrb[0].mxu0
        %v1032 = vadd.f32 %v929, %v1031
        %v1033 = vpop.f32.mrb[0].mxu0
        %v1034 = vadd.f32 %v933, %v1033
        %v1035 = vpop.f32.mrb[0].mxu0
        %v1036 = vadd.f32 %v933, %v1035
        %1037 = vmatprep.mubr.bf16.mxu0 0
        %1038 = vmatmul.mubr.bf16.gmra.mrb[0].mxu0 %v973
        %v1039 = vpop.f32.mrb[0].mxu0
        %v1040 = vadd.f32 %v937, %v1039
        %v1041 = vpop.f32.mrb[0].mxu0
        %v1042 = vadd.f32 %v937, %v1041
        %v1043 = vpop.f32.mrb[0].mxu0
        %v1044 = vadd.f32 %v941, %v1043
        %v1045 = vpop.f32.mrb[0].mxu0
        %v1046 = vadd.f32 %v941, %v1045
        %1047 = vdwg.mxu0
        %1048 = vmatprep.subr.bf16.mxu0 %v889
        %1049 = vmatpush1.bf16.msra.mxu0 %v888
        %1050 = vmatprep.subr.bf16.mxu0 %v893
        %1051 = vmatpush1.bf16.msra.mxu0 %v892
        %1052 = vmatprep.subr.bf16.mxu0 %v897
        %1053 = vmatpush1.bf16.msra.mxu0 %v896
        %1054 = vmatprep.subr.bf16.mxu0 %v901
        %1055 = vmatpush1.bf16.msra.mxu0 %v900
        %1056 = vmatprep.subr.bf16.mxu0 0
        %1057 = vmatpush1.bf16.msra.mxu0 0
        %1058 = vmatprep.subr.bf16.mxu0 0
        %1059 = vmatpush1.bf16.msra.mxu0 0
        %1060 = vmatprep.subr.bf16.mxu0 0
        %1061 = vmatpush1.bf16.msra.mxu0 0
        %1062 = vmatprep.subr.bf16.mxu0 0
        %1063 = vmatpush1.bf16.msra.mxu0 0
        %1064 = vmatprep.subr.bf16.mxu0 0
        %1065 = vmatpush1.bf16.msra.mxu0 0
        %1066 = vmatprep.subr.bf16.mxu0 0
        %1067 = vmatpush1.bf16.msra.mxu0 0
        %1068 = vmatprep.subr.bf16.mxu0 0
        %1069 = vmatpush1.bf16.msra.mxu0 0
        %1070 = vmatprep.subr.bf16.mxu0 0
        %1071 = vmatpush1.bf16.msra.mxu0 0
        %1072 = vmatprep.subr.bf16.mxu0 0
        %1073 = vmatpush1.bf16.msra.mxu0 0
        %1074 = vmatprep.subr.bf16.mxu0 0
        %1075 = vmatpush1.bf16.msra.mxu0 0
        %1076 = vmatprep.subr.bf16.mxu0 0
        %1077 = vmatpush1.bf16.msra.mxu0 0
        %1078 = vmatprep.subr.bf16.mxu0 0
        %1079 = vmatpush1.bf16.msra.mxu0 0
        %1080 = vmatprep.mubr.bf16.mxu0 0
        %1081 = vmatmul.mubr.bf16.gmra.mrb[0].mxu0 %v964
        %v1082 = vpop.f32.mrb[0].mxu0
        %v1083 = vadd.f32 %v913, %v1082
        %v1084 = vpop.f32.mrb[0].mxu0
        %v1085 = vadd.f32 %v913, %v1084
        %v1086 = vpop.f32.mrb[0].mxu0
        %v1087 = vadd.f32 %v917, %v1086
        %v1088 = vpop.f32.mrb[0].mxu0
        %v1089 = vadd.f32 %v917, %v1088
        %1090 = vmatprep.mubr.bf16.mxu0 0
        %1091 = vmatmul.mubr.bf16.gmra.mrb[0].mxu0 %v967
        %v1092 = vpop.f32.mrb[0].mxu0
        %v1093 = vadd.f32 %v921, %v1092
        %v1094 = vpop.f32.mrb[0].mxu0
        %v1095 = vadd.f32 %v921, %v1094
        %v1096 = vpop.f32.mrb[0].mxu0
        %v1097 = vadd.f32 %v925, %v1096
        %v1098 = vpop.f32.mrb[0].mxu0
        %v1099 = vadd.f32 %v925, %v1098
        %1100 = vmatprep.mubr.bf16.mxu0 0
        %1101 = vmatmul.mubr.bf16.gmra.mrb[0].mxu0 %v970
        %v1102 = vpop.f32.mrb[0].mxu0
        %v1103 = vadd.f32 %v929, %v1102
        %v1104 = vpop.f32.mrb[0].mxu0
        %v1105 = vadd.f32 %v929, %v1104
        %v1106 = vpop.f32.mrb[0].mxu0
        %v1107 = vadd.f32 %v933, %v1106
        %v1108 = vpop.f32.mrb[0].mxu0
        %v1109 = vadd.f32 %v933, %v1108
        %1110 = vmatprep.mubr.bf16.mxu0 0
        %1111 = vmatmul.mubr.bf16.gmra.mrb[0].mxu0 %v973
        %v1112 = vpop.f32.mrb[0].mxu0
        %v1113 = vadd.f32 %v937, %v1112
        %v1114 = vpop.f32.mrb[0].mxu0
        %v1115 = vadd.f32 %v937, %v1114
        %v1116 = vpop.f32.mrb[0].mxu0
        %v1117 = vadd.f32 %v941, %v1116
        %v1118 = vpop.f32.mrb[0].mxu0
        %v1119 = vadd.f32 %v941, %v1118
        %1120 = vdwg.mxu0
        %v1121 = vpack.c.bf16 %v1014, %v1010
        %v1122 = vpack.c.bf16 %v1016, %v1012
        %v1123 = vpack.c.bf16 %v1087, %v1083
        %v1124 = vpack.c.bf16 %v1089, %v1085
        %v1125 = vpack.c.bf16 %v1024, %v1020
        %v1126 = vpack.c.bf16 %v1026, %v1022
        %v1127 = vpack.c.bf16 %v1097, %v1093
        %v1128 = vpack.c.bf16 %v1099, %v1095
        %v1129 = vpack.c.bf16 %v1034, %v1030
        %v1130 = vpack.c.bf16 %v1036, %v1032
        %v1131 = vpack.c.bf16 %v1107, %v1103
        %v1132 = vpack.c.bf16 %v1109, %v1105
        %v1133 = vpack.c.bf16 %v1044, %v1040
        %v1134 = vpack.c.bf16 %v1046, %v1042
        %v1135 = vpack.c.bf16 %v1117, %v1113
        %v1136 = vpack.c.bf16 %v1119, %v1115
        %v1137 = vtanh.bf16.pop %v1121
        %v1138 = vtanh.bf16.pop %v1122
        %v1139 = vtanh.bf16.pop %v1123
        %v1140 = vtanh.bf16.pop %v1124
        %v1141 = vtanh.bf16.pop %v1125
        %v1142 = vtanh.bf16.pop %v1126
        %v1143 = vtanh.bf16.pop %v1127
        %v1144 = vtanh.bf16.pop %v1128
        %v1145 = vtanh.bf16.pop %v1129
        %v1146 = vtanh.bf16.pop %v1130
        %v1147 = vtanh.bf16.pop %v1131
        %v1148 = vtanh.bf16.pop %v1132
        %v1149 = vtanh.bf16.pop %v1133
        %v1150 = vtanh.bf16.pop %v1134
        %v1151 = vtanh.bf16.pop %v1135
        %v1152 = vtanh.bf16.pop %v1136
        %v1153 = vld [vmem:[%s3] sm:$0xf]
        %1154 = vset.pattern.permute.xlu0 6
        %1155 = vperm.xlu0 %1154, %v220
        %v1156 = vpop.permute.xlu0 %1155
        %v1159 = vsel %vm711, %v1153, 0
        %1161 = vmatprep.subr.bf16.mxu0 %v1138
        %1162 = vmatpush1.bf16.msra.mxu0 %v1137
        %1163 = vmatprep.subr.bf16.mxu0 %v1142
        %1164 = vmatpush1.bf16.msra.mxu0 %v1141
        %1165 = vmatprep.subr.bf16.mxu0 %v1146
        %1166 = vmatpush1.bf16.msra.mxu0 %v1145
        %1167 = vmatprep.subr.bf16.mxu0 %v1150
        %1168 = vmatpush1.bf16.msra.mxu0 %v1149
        %1169 = vmatprep.subr.bf16.mxu0 0
        %1170 = vmatpush1.bf16.msra.mxu0 0
        %1171 = vmatprep.subr.bf16.mxu0 0
        %1172 = vmatpush1.bf16.msra.mxu0 0
        %1173 = vmatprep.subr.bf16.mxu0 0
        %1174 = vmatpush1.bf16.msra.mxu0 0
        %1175 = vmatprep.subr.bf16.mxu0 0
        %1176 = vmatpush1.bf16.msra.mxu0 0
        %1177 = vmatprep.subr.bf16.mxu0 0
        %1178 = vmatpush1.bf16.msra.mxu0 0
        %1179 = vmatprep.subr.bf16.mxu0 0
        %1180 = vmatpush1.bf16.msra.mxu0 0
        %1181 = vmatprep.subr.bf16.mxu0 0
        %1182 = vmatpush1.bf16.msra.mxu0 0
        %1183 = vmatprep.subr.bf16.mxu0 0
        %1184 = vmatpush1.bf16.msra.mxu0 0
        %1185 = vmatprep.subr.bf16.mxu0 0
        %1186 = vmatpush1.bf16.msra.mxu0 0
        %1187 = vmatprep.subr.bf16.mxu0 0
        %1188 = vmatpush1.bf16.msra.mxu0 0
        %1189 = vmatprep.subr.bf16.mxu0 0
        %1190 = vmatpush1.bf16.msra.mxu0 0
        %1191 = vmatprep.subr.bf16.mxu0 0
        %1192 = vmatpush1.bf16.msra.mxu0 0
        %1193 = vmatprep.mubr.bf16.mxu0 0
        %1194 = vmatmul.mubr.bf16.gmra.mrb[0].mxu0 %v1159
        %v1195 = vpop.f32.mrb[0].mxu0
        %v1196 = vadd.f32 %v1156, %v1195
        %v1197 = vpop.f32.mrb[0].mxu0
        %v1198 = vadd.f32 %v1156, %v1197
        %v1199 = vpop.f32.mrb[0].mxu0
        %v1200 = vpop.f32.mrb[0].mxu0
        %1201 = vdwg.mxu0
        %1202 = vmatprep.subr.bf16.mxu0 %v1140
        %1203 = vmatpush1.bf16.msra.mxu0 %v1139
        %1204 = vmatprep.subr.bf16.mxu0 %v1144
        %1205 = vmatpush1.bf16.msra.mxu0 %v1143
        %1206 = vmatprep.subr.bf16.mxu0 %v1148
        %1207 = vmatpush1.bf16.msra.mxu0 %v1147
        %1208 = vmatprep.subr.bf16.mxu0 %v1152
        %1209 = vmatpush1.bf16.msra.mxu0 %v1151
        %1210 = vmatprep.subr.bf16.mxu0 0
        %1211 = vmatpush1.bf16.msra.mxu0 0
        %1212 = vmatprep.subr.bf16.mxu0 0
        %1213 = vmatpush1.bf16.msra.mxu0 0
        %1214 = vmatprep.subr.bf16.mxu0 0
        %1215 = vmatpush1.bf16.msra.mxu0 0
        %1216 = vmatprep.subr.bf16.mxu0 0
        %1217 = vmatpush1.bf16.msra.mxu0 0
        %1218 = vmatprep.subr.bf16.mxu0 0
        %1219 = vmatpush1.bf16.msra.mxu0 0
        %1220 = vmatprep.subr.bf16.mxu0 0
        %1221 = vmatpush1.bf16.msra.mxu0 0
        %1222 = vmatprep.subr.bf16.mxu0 0
        %1223 = vmatpush1.bf16.msra.mxu0 0
        %1224 = vmatprep.subr.bf16.mxu0 0
        %1225 = vmatpush1.bf16.msra.mxu0 0
        %1226 = vmatprep.subr.bf16.mxu0 0
        %1227 = vmatpush1.bf16.msra.mxu0 0
        %1228 = vmatprep.subr.bf16.mxu0 0
        %1229 = vmatpush1.bf16.msra.mxu0 0
        %1230 = vmatprep.subr.bf16.mxu0 0
        %1231 = vmatpush1.bf16.msra.mxu0 0
        %1232 = vmatprep.subr.bf16.mxu0 0
        %1233 = vmatpush1.bf16.msra.mxu0 0
        %1234 = vmatprep.mubr.bf16.mxu0 0
        %1235 = vmatmul.mubr.bf16.gmra.mrb[0].mxu0 %v1159
        %v1236 = vpop.f32.mrb[0].mxu0
        %v1237 = vadd.f32 %v1156, %v1236
        %v1238 = vpop.f32.mrb[0].mxu0
        %v1239 = vadd.f32 %v1156, %v1238
        %v1240 = vpop.f32.mrb[0].mxu0
        %v1241 = vpop.f32.mrb[0].mxu0
        %1242 = vdwg.mxu0
        %1243 = vst [vmem:[%s206] sm:$0xff] %v1196
        %1244 = vst [vmem:[%s206 + $0x8] sm:$0xff] %v1198
        %1245 = vst [vmem:[%s206 + $0x10] sm:$0xff] %v1237
        %1246 = vst [vmem:[%s206 + $0x18] sm:$0xff] %v1239
        %s1247 = sand.u32 %s116, 1
        %s1248 = scalar_lea.sflag [#allocation4], %s1247
        %s1249 = sand.u32 %s116, 1
        %s1250 = smul.addr %s1249, 32
        %s1251 = scalar_lea.vmem [#allocation5], %s1250
        // Predicated region
        $region41: #{tpu_custom_call.1} parent=35 // pred_check
          %p1252 = pneg %p126
        $region42: #{tpu_custom_call.1} parent=35 // pred_check_branch
          %1254 = sbr.rel (%p1252) target = $region44
        $region43: #{tpu_custom_call.1} parent=35 // pred_region
          %s1255 = smul.u32 4, %s19
          %s1257 = ssub.s32 512, 512
          %1258 = vsyncadd %s1248, %s1257
          %s1259 = smul.addr %s1255, 128
          %s1260 = scalar_lea.hbm %s4, %s1259
          %s1262 = sshll.u32 %s1251, 4
          %s1263 = int_to_ptr.vmem [resolvable:$true] %s1262
          %1265 = dma.vmem_to_hbm [thread:$0]  %s1263, 512, %s1260, %s1248
        $region44: #{tpu_custom_call.1} parent=35 // pred_fallthru
          _
      $region36: #{tpu_custom_call.1} parent=5 // pred_fallthru
        _
      %p1266 = scmp.le.s32.totalorder 2, %s14
      // Predicated region
      $region45: #{tpu_custom_call.1} parent=5 // pred_check
        %p1267 = pneg %p1266
      $region46: #{tpu_custom_call.1} parent=5 // pred_check_branch
        %1269 = sbr.rel (%p1267) target = $region48
      $region47: #{tpu_custom_call.1} parent=5 // pred_region
        %s1270 = ssub.s32 %s14, 2
        // Predicated region
        $region49: #{tpu_custom_call.1} parent=47 // pred_check
          %p1271 = pneg %p132
        $region50: #{tpu_custom_call.1} parent=47 // pred_check_branch
          %1273 = sbr.rel (%p1271) target = $region52
        $region51: #{tpu_custom_call.1} parent=47 // pred_region
          %s1274 = sand.u32 %s117, 1
          %s1275 = scalar_lea.sflag [#allocation4], %s1274
          %s1276 = sand.u32 %s117, 1
          %s1277 = smul.addr %s1276, 32
          %s1278 = scalar_lea.vmem [#allocation5], %s1277
          %1279 = dma.done %s1275, 512
        $region52: #{tpu_custom_call.1} parent=47 // pred_fallthru
          _
      $region48: #{tpu_custom_call.1} parent=5 // pred_fallthru
        _
    $region6: #{tpu_custom_call.1} parent=1 // loop_footer
      %s18 = sadd.s32 1, %s14
    $region7: #{tpu_custom_call.1} parent=1 // loop_footer_branch
      %13 = sbr.rel target = $region3
    $region8: #{tpu_custom_call.1} parent=1 // loop_exit
      _
    %1280 = vsyncpa [#allocation3], 1
    %s1281 = scalar_lea.sflag [#allocation3], 1
    %1282 = vsyncpa %s1281, 1
    %1283 = vsyncpa [#allocation4], 1
    %s1284 = scalar_lea.sflag [#allocation4], 1
    %1285 = vsyncpa %s1284, 1

</llo_original>
